<compile_context>
chip_gen: v7x
topology: tpu7x:2x2x1
jax: 0.10.0
libtpu: 0.0.40
codegen_flags: <defaults>
</compile_context>

<pallas_src>
import jax
import jax.numpy as jnp
from jax.experimental import pallas as pl
from jax.experimental.pallas import tpu as pltpu


# ----------------------------- kernels --------------------------------------

def _copy_kernel(x_ref, o_ref):
    # Path A: the channel permutation is done entirely by the BlockSpec
    # index_maps, so the body degenerates to a single block copy.
    o_ref[...] = x_ref[...]


def _make_interleave_kernel(groups: int):
    # Path B: x_ref is (b_tile, G, cpg_tile, HW), o_ref is (b_tile, cpg_tile, G, HW).
    # Writing sublane g of the output tile from slab g of the input tile is the
    # channel shuffle; G is small and static, so this is a short unrolled loop
    # of well-supported slab reads / single-sublane stores, all inside VMEM.
    def kernel(x_ref, o_ref):
        for g in range(groups):                      # static unroll
            o_ref[:, :, g, :] = x_ref[:, g, :, :]
    return kernel


# ----------------------------- helpers --------------------------------------

def _round_up(n: int, m: int) -> int:
    return ((n + m - 1) // m) * m


def _sublane_multiple(dtype) -> int:
    # Packed sub-32-bit dtypes need 16 (bf16) / 32 (int8, fp8) sublanes per tile.
    itemsize = jnp.dtype(dtype).itemsize
    return max(8, 32 // max(1, itemsize))


def _vmem_capacity_bytes() -> int:
    try:
        cap = int(pltpu.get_tpu_info().vmem_capacity_bytes)
        if cap > 0:
            return cap
    except Exception:
        pass
    return 64 << 20  # conservative (v7x-sized) default


def _pick_tile(n: int, unit_bytes: int, sub: int, target_bytes: int) -> int:
    """Largest divisor t of n with (t % sub == 0 or t == n) and
    t * unit_bytes <= target_bytes; falls back to the smallest legal divisor."""
    best = None
    for t in range(1, n + 1):
        if n % t:
            continue
        if (t % sub != 0) and (t != n):
            continue
        if t * unit_bytes <= target_bytes:
            best = t
    if best is not None:
        return best
    for t in range(1, n + 1):
        if n % t == 0 and ((t % sub == 0) or (t == n)):
            return t
    return n


def _largest_proper_divisor(n: int) -> int:
    for d in range(n // 2, 0, -1):
        if n % d == 0:
            return d
    return 1


# ----------------------------- paths ----------------------------------------

def _shuffle_blockspec(x4, B, G, cpg, HW, itemsize, sub,
                       target_bytes, vmem_limit, cost):
    """Path A: permutation via BlockSpec only; used when HW runs are large."""
    hw_pad = _round_up(HW, 128)
    unit = hw_pad * itemsize                      # VMEM bytes per channel row
    cpg_tile = _pick_tile(cpg, unit, sub, target_bytes)
    b_tile = 1
    if cpg_tile == cpg:
        b_tile = _pick_tile(B, cpg * unit, 1, target_bytes)
    grid = (B // b_tile, G, cpg // cpg_tile)      # >= G >= 2 steps (megacore ok)

    return pl.pallas_call(
        _copy_kernel,
        out_shape=jax.ShapeDtypeStruct((B, cpg, G, HW), x4.dtype),
        grid_spec=pltpu.PrefetchScalarGridSpec(
            num_scalar_prefetch=0,
            grid=grid,
            in_specs=[pl.BlockSpec((b_tile, None, cpg_tile, HW),
                                   lambda b, g, t: (b, g, t, 0))],
            out_specs=pl.BlockSpec((b_tile, cpg_tile, None, HW),
                                   lambda b, g, t: (b, t, g, 0)),
        ),
        compiler_params=pltpu.CompilerParams(
            dimension_semantics=("parallel", "parallel", "parallel"),
            vmem_limit_bytes=vmem_limit),
        cost_estimate=cost,
    )(x4)


def _shuffle_contiguous(x4, B, G, cpg, HW, itemsize, sub,
                        target_bytes, vmem_limit, cost):
    """Path B: full-group blocks (contiguous HBM on both sides) + in-VMEM swap."""
    hw_pad = _round_up(HW, 128)
    # Per-cpg-channel VMEM bytes, covering both the input (G rows) and the
    # output (G rows padded up to the sublane tile) representations.
    unit = max(G, _round_up(G, sub)) * hw_pad * itemsize
    cpg_tile = _pick_tile(cpg, unit, sub, target_bytes)
    b_tile = 1
    if cpg_tile == cpg:
        b_tile = _pick_tile(B, cpg * unit, 1, target_bytes)
    # v7x megacore: avoid a degenerate single-step grid when there is work to split.
    if (B // b_tile) * (cpg // cpg_tile) == 1 and B > 1:
        b_tile = _largest_proper_divisor(B)
    grid = (B // b_tile, cpg // cpg_tile)

    return pl.pallas_call(
        _make_interleave_kernel(G),
        out_shape=jax.ShapeDtypeStruct((B, cpg, G, HW), x4.dtype),
        grid_spec=pltpu.PrefetchScalarGridSpec(
            num_scalar_prefetch=0,
            grid=grid,
            in_specs=[pl.BlockSpec((b_tile, G, cpg_tile, HW),
                                   lambda b, t: (b, 0, t, 0))],
            out_specs=pl.BlockSpec((b_tile, cpg_tile, G, HW),
                                   lambda b, t: (b, t, 0, 0)),
        ),
        compiler_params=pltpu.CompilerParams(
            dimension_semantics=("parallel", "parallel"),
            vmem_limit_bytes=vmem_limit),
        cost_estimate=cost,
    )(x4)


# ----------------------------- public API -----------------------------------

_PATH_A_MIN_RUN_BYTES = 32 * 1024   # contiguous HBM run large enough for Path A


def shuffle_layer(x: jax.Array, groups: int) -> jax.Array:
    """Pallas channel shuffle; x is NCHW (matches the PyTorch ShuffleLayer)."""
    B, C, H, W = x.shape
    G = int(groups)
    assert C % G == 0, "num_channels must be divisible by groups"
    cpg = C // G

    # Identity cases: G == 1 or cpg == 1 -> nothing to move.
    if G == 1 or cpg == 1:
        return x

    HW = H * W
    itemsize = jnp.dtype(x.dtype).itemsize
    sub = _sublane_multiple(x.dtype)

    vmem_cap = _vmem_capacity_bytes()
    # ~1/16 of VMEM per block (2x double-buffered in + out = 4 live blocks),
    # capped at 8 MiB: ~4 MiB blocks on v7x (64 MiB VMEM), ~8 MiB on v5e/v6e.
    target_bytes = max(1 << 20, min(8 << 20, vmem_cap // 16))
    vmem_limit = max(32 << 20, min(vmem_cap * 3 // 4, 100 << 20))

    cost = pl.CostEstimate(flops=0, transcendentals=0,
                           bytes_accessed=2 * B * C * HW * itemsize)

    # in[b, g, i, hw] == x[b, g*cpg + i, h, w] -- pure reshape, layout only.
    x4 = x.reshape(B, G, cpg, HW)

    run_bytes = HW * itemsize
    min_path_b_block = G * min(cpg, sub) * HW * itemsize
    use_path_b = (run_bytes < _PATH_A_MIN_RUN_BYTES
                  and min_path_b_block <= 2 * target_bytes)

    if use_path_b:
        out4 = _shuffle_contiguous(x4, B, G, cpg, HW, itemsize, sub,
                                   target_bytes, vmem_limit, cost)
    else:
        out4 = _shuffle_blockspec(x4, B, G, cpg, HW, itemsize, sub,
                                  target_bytes, vmem_limit, cost)

    # (B, cpg, G, HW) -> (B, C, H, W): flat out-channel index is i*G + g.
    return out4.reshape(B, C, H, W)


def shuffle_ref(x: jax.Array, groups: int) -> jax.Array:
    """Pure-JAX reference matching the PyTorch forward exactly."""
    B, C, H, W = x.shape
    cpg = C // groups
    y = x.reshape(B, groups, cpg, H, W)
    y = jnp.transpose(y, (0, 2, 1, 3, 4))
    return y.reshape(B, C, H, W)


if __name__ == "__main__":
    key = jax.random.PRNGKey(0)

    # 1) Small lane-dense case (HW = 256) -> contiguous (Path B) kernel.
    x = jax.random.normal(key, (2, 4, 16, 16), dtype=jnp.float32)
    out = jax.block_until_ready(shuffle_layer(x, 2))
    ref = shuffle_ref(x, 2)
    assert out.shape == ref.shape and out.dtype == ref.dtype
    assert jnp.array_equal(out, ref), "contiguous path mismatch"

    # 2) Odd spatial size (HW not a multiple of 128) -> contiguous path, lane-padded.
    k2 = jax.random.fold_in(key, 1)
    x2 = jax.random.normal(k2, (2, 6, 7, 9), dtype=jnp.float32)
    out2 = jax.block_until_ready(shuffle_layer(x2, 3))
    assert jnp.array_equal(out2, shuffle_ref(x2, 3)), "odd-size path mismatch"

    # 3) Large spatial size (>= 32 KiB contiguous runs) -> pure-BlockSpec (Path A).
    k3 = jax.random.fold_in(key, 2)
    x3 = jax.random.normal(k3, (1, 8, 96, 96), dtype=jnp.float32)
    out3 = jax.block_until_ready(shuffle_layer(x3, 4))
    assert jnp.array_equal(out3, shuffle_ref(x3, 4)), "blockspec path mismatch"

    # 4) groups == 1 is the identity and must not launch a kernel.
    out4 = shuffle_layer(x, 1)
    assert jnp.array_equal(out4, x), "identity short-circuit mismatch"

    print("KERNEL_OK")
</pallas_src>

<mosaic_0001>
module attributes {stable_mosaic.version = 11 : i64} {
  func.func @kernel(%arg0: i32, %arg1: i32, %arg2: memref<1x2x2x256xf32, #tpu.memory_space<vmem>>, %arg3: memref<1x2x2x256xf32, #tpu.memory_space<vmem>>) attributes {dimension_semantics = [#tpu.dimension_semantics<parallel>, #tpu.dimension_semantics<parallel>], iteration_bounds = array<i64: 2, 1>, scalar_prefetch = 0 : i64, scratch_operands = 0 : i64, tpu.core_type = #tpu.core_type<tc>, window_params = [{transform_indices = @transform_0, window_bounds = array<i64: 1, 2, 2, 256>}, {transform_indices = @transform_1, window_bounds = array<i64: 1, 2, 2, 256>}]} {
    %c0 = arith.constant 0 : index
    %c0_0 = arith.constant 0 : index
    %c0_1 = arith.constant 0 : index
    %c0_2 = arith.constant 0 : index
    %0 = vector.load %arg2[%c0, %c0_0, %c0_1, %c0_2] : memref<1x2x2x256xf32, #tpu.memory_space<vmem>>, vector<1x1x2x256xf32>
    %1 = vector.shape_cast %0 : vector<1x1x2x256xf32> to vector<1x2x256xf32>
    %c0_3 = arith.constant 0 : index
    %c0_4 = arith.constant 0 : index
    %c0_5 = arith.constant 0 : index
    %c0_6 = arith.constant 0 : index
    %2 = vector.load %arg3[%c0_3, %c0_4, %c0_5, %c0_6] : memref<1x2x2x256xf32, #tpu.memory_space<vmem>>, vector<1x2x1x256xf32>
    %3 = vector.shape_cast %2 : vector<1x2x1x256xf32> to vector<1x2x256xf32>
    %4 = vector.shape_cast %1 : vector<1x2x256xf32> to vector<1x2x1x256xf32>
    tpu.vector_store %arg3[%c0_3, %c0_4, %c0_5, %c0_6], %4 {strides = array<i32>} : memref<1x2x2x256xf32, #tpu.memory_space<vmem>>, vector<1x2x1x256xf32>,
    %c0_7 = arith.constant 0 : index
    %c1 = arith.constant 1 : index
    %c0_8 = arith.constant 0 : index
    %c0_9 = arith.constant 0 : index
    %5 = vector.load %arg2[%c0_7, %c1, %c0_8, %c0_9] : memref<1x2x2x256xf32, #tpu.memory_space<vmem>>, vector<1x1x2x256xf32>
    %6 = vector.shape_cast %5 : vector<1x1x2x256xf32> to vector<1x2x256xf32>
    %c0_10 = arith.constant 0 : index
    %c0_11 = arith.constant 0 : index
    %c1_12 = arith.constant 1 : index
    %c0_13 = arith.constant 0 : index
    %7 = vector.load %arg3[%c0_10, %c0_11, %c1_12, %c0_13] : memref<1x2x2x256xf32, #tpu.memory_space<vmem>>, vector<1x2x1x256xf32>
    %8 = vector.shape_cast %7 : vector<1x2x1x256xf32> to vector<1x2x256xf32>
    %9 = vector.shape_cast %6 : vector<1x2x256xf32> to vector<1x2x1x256xf32>
    tpu.vector_store %arg3[%c0_10, %c0_11, %c1_12, %c0_13], %9 {strides = array<i32>} : memref<1x2x2x256xf32, #tpu.memory_space<vmem>>, vector<1x2x1x256xf32>,
    return
  }
  func.func @transform_0(%arg0: i32, %arg1: i32) -> (i32, i32, i32, i32) {
    %c0_i32 = arith.constant 0 : i32
    %c0_i32_0 = arith.constant 0 : i32
    %c0_i32_1 = arith.constant 0 : i32
    return %arg0, %c0_i32, %arg1, %c0_i32_0 : i32, i32, i32, i32
  }
  func.func @transform_1(%arg0: i32, %arg1: i32) -> (i32, i32, i32, i32) {
    %c0_i32 = arith.constant 0 : i32
    %c0_i32_0 = arith.constant 0 : i32
    %c0_i32_1 = arith.constant 0 : i32
    return %arg0, %arg1, %c0_i32, %c0_i32_0 : i32, i32, i32, i32
  }
}

</mosaic_0001>

<llo_original>
// kernel: tpu_custom_call.1
$region0: #{tpu_custom_call.1}
  #allocation0 [shape = 'u32[]', space=smem, size = 0x4, offset = 0x4, fixed_abs, tag = 'smem constant byte address 0x4 - core index']
  #allocation1 [shape = 'u32[144,128]{1,0:T(1,128)}', space=vmem, size = 0x12000, scoped, tag = 'internal scratch']
  %s0 = inlined_call_operand.hbm [shape: f32[2,2,2,256], index: 0, kind: input, shape index: {}]
  %s1 = inlined_call_operand.hbm [shape: f32[2,2,2,256], index: 1, kind: output, shape index: {}]
  %s2 = sld [smem:[#allocation0]]
  $region41: #{tpu_custom_call.1} parent=0
    _
  %s4 = ssub.s32 1, %s2
  %s5 = scalar_select 0, %s4, %s2
  $region1: #{tpu_custom_call.1} parent=0
    #allocation2 [shape = 'u8[8192]{0}', space=vmem, size = 0x2000, scoped, tag = 'input window, operand 0']
    #allocation3 [shape = 's32[2]{0}', space=sflag, size = 0x8, scoped, tag = 'scoped memory for tpu_custom_call.1']
    #allocation4 [shape = 's32[2]{0}', space=sflag, size = 0x8, scoped, tag = 'scoped memory for tpu_custom_call.1']
    #allocation5 [shape = 'u8[8192]{0}', space=vmem, size = 0x2000, scoped, tag = 'output window, operand 0']
    %6 = vsyncpa [#allocation3], 0
    %s7 = scalar_lea.sflag [#allocation3], 1
    %8 = vsyncpa %s7, 0
    %9 = vsyncpa [#allocation4], 0
    %s10 = scalar_lea.sflag [#allocation4], 1
    %11 = vsyncpa %s10, 0
    loop: start=0, step=1, limit=4
    $region2: #{tpu_custom_call.1} parent=1 // loop_pre_header
      _
    $region3: #{tpu_custom_call.1} parent=1 // loop_header
      %s13 = sphi 0, %s17
      %p14 = scmp.ge.s32.totalorder %s13, 4
      %s20 = sphi 0, %s32
      %s21 = sphi 0, %s28
      %s22 = sphi 0, %s20
      %s23 = sphi 0, %s21
      %s24 = sphi 0, %s22
      %s25 = sphi 0, %s23
      %s37 = sphi 0, %s39
      %s40 = sphi 0, %s37
      %s41 = sphi 0, %s40
      %s57 = sphi 0, %s41
      %s65 = sphi 0, %s67
      %s68 = sphi 0, %s65
      %s69 = sphi 0, %s68
      %s85 = sphi 0, %s69
    $region4: #{tpu_custom_call.1} parent=1 // loop_header_branch
      %16 = sbr.rel (%p14) target = $region8
    $region5: #{tpu_custom_call.1} parent=1 // loop_body
      %s18 = ssub.s32 %s13, 1
      %s19 = ssub.s32 %s13, 2
      %s26 = sadd.s32 1, %s21
      %p27 = scmp.ge.s32.totalorder %s26, 1
      %s28 = scalar_select %p27, 0, %s26
      %s29 = sadd.s32 1, %s20
      %s30 = scalar_select %p27, %s29, %s20
      %p31 = scmp.ge.s32.totalorder %s30, 2
      %s32 = scalar_select %p31, 0, %s30
      %s33 = ssub.s32 %s20, %s32
      %s34 = ssub.s32 %s21, %s28
      %s35 = sor.u32 %s33, %s34
      %p36 = scmp.eq.s32.totalorder %s35, 0
      %s38 = sadd.s32 %s37, 1
      %s39 = scalar_select %p36, %s37, %s38
      %p42 = pneg %p36
      %p43 = scmp.eq.s32.totalorder %s13, 1
      %p44 = por %p42, %p43
      %p45 = scmp.ne.s32.totalorder %s37, %s40
      %p46 = scmp.eq.s32.totalorder %s13, 0
      %p47 = por %p45, %p46
      %p48 = scmp.ne.s32.totalorder %s37, %s40
      %p49 = scmp.eq.s32.totalorder %s18, 1
      %p50 = por %p48, %p49
      %p51 = scmp.ne.s32.totalorder %s40, %s41
      %p52 = scmp.eq.s32.totalorder %s18, 0
      %p53 = por %p51, %p52
      %p54 = scmp.ne.s32.totalorder %s40, %s41
      %p55 = scmp.eq.s32.totalorder %s19, 1
      %p56 = por %p54, %p55
      %p58 = scmp.ne.s32.totalorder %s41, %s57
      %p59 = scmp.eq.s32.totalorder %s19, 0
      %p60 = por %p58, %p59
      %s61 = ssub.s32 %s20, %s32
      %s62 = ssub.s32 %s21, %s28
      %s63 = sor.u32 %s61, %s62
      %p64 = scmp.eq.s32.totalorder %s63, 0
      %s66 = sadd.s32 %s65, 1
      %s67 = scalar_select %p64, %s65, %s66
      %p70 = pneg %p64
      %p71 = scmp.eq.s32.totalorder %s13, 1
      %p72 = por %p70, %p71
      %p73 = scmp.ne.s32.totalorder %s65, %s68
      %p74 = scmp.eq.s32.totalorder %s13, 0
      %p75 = por %p73, %p74
      %p76 = scmp.ne.s32.totalorder %s65, %s68
      %p77 = scmp.eq.s32.totalorder %s18, 1
      %p78 = por %p76, %p77
      %p79 = scmp.ne.s32.totalorder %s68, %s69
      %p80 = scmp.eq.s32.totalorder %s18, 0
      %p81 = por %p79, %p80
      %p82 = scmp.ne.s32.totalorder %s68, %s69
      %p83 = scmp.eq.s32.totalorder %s19, 1
      %p84 = por %p82, %p83
      %p86 = scmp.ne.s32.totalorder %s69, %s85
      %p87 = scmp.eq.s32.totalorder %s19, 0
      %p88 = por %p86, %p87
      %p89 = scmp.le.s32.totalorder 1, %s13
      %p90 = scmp.lt.s32.totalorder %s13, 3
      %p91 = pnand %p89, %p90
      %p92 = pneg %p91
      // Predicated region
      $region9: #{tpu_custom_call.1} parent=5 // pred_check
        _
      $region10: #{tpu_custom_call.1} parent=5 // pred_check_branch
        %94 = sbr.rel (%p91) target = $region12
      $region11: #{tpu_custom_call.1} parent=5 // pred_region
        %s95 = ssub.s32 %s13, 1
      $region12: #{tpu_custom_call.1} parent=5 // pred_fallthru
        _
      %p96 = scmp.lt.s32.totalorder %s13, 2
      // Predicated region
      $region13: #{tpu_custom_call.1} parent=5 // pred_check
        %p97 = pneg %p96
      $region14: #{tpu_custom_call.1} parent=5 // pred_check_branch
        %99 = sbr.rel (%p97) target = $region16
      $region15: #{tpu_custom_call.1} parent=5 // pred_region
        // Predicated region
        $region17: #{tpu_custom_call.1} parent=15 // pred_check
          %p100 = pneg %p47
        $region18: #{tpu_custom_call.1} parent=15 // pred_check_branch
          %102 = sbr.rel (%p100) target = $region20
        $region19: #{tpu_custom_call.1} parent=15 // pred_region
          %s103 = sand.u32 %s37, 1
          %s104 = scalar_lea.sflag [#allocation3], %s103
          %s105 = sand.u32 %s37, 1
          %s106 = smul.addr %s105, 8
          %s107 = scalar_lea.vmem [#allocation2], %s106
          %s109 = ssub.s32 128, 128
          %110 = vsyncadd %s104, %s109
          %s111 = smul.addr %s21, 2
          %s112 = smul.addr %s20, 4
          %s113 = sadd.s32 %s111, %s112
          %s114 = smul.addr %s113, 32
          %s115 = scalar_lea.hbm %s0, %s114
          %s116 = sshll.u32 %s107, 4
          %s117 = int_to_ptr.vmem [resolvable:$true] %s116
          %122 = dma.hbm_to_vmem [thread:$0]  %s115, 128, %s117, %s104, 64, 64, 4
        $region20: #{tpu_custom_call.1} parent=15 // pred_fallthru
          _
      $region16: #{tpu_custom_call.1} parent=5 // pred_fallthru
        _
      %p123 = scmp.le.s32.totalorder 1, %s13
      %p124 = scmp.lt.s32.totalorder %s13, 3
      %p125 = pnand %p123, %p124
      %p126 = pneg %p125
      // Predicated region
      $region21: #{tpu_custom_call.1} parent=5 // pred_check
        _
      $region22: #{tpu_custom_call.1} parent=5 // pred_check_branch
        %128 = sbr.rel (%p125) target = $region24
      $region23: #{tpu_custom_call.1} parent=5 // pred_region
        %s129 = ssub.s32 %s13, 1
        %s130 = sand.u32 %s40, 1
        %s131 = scalar_lea.sflag [#allocation3], %s130
        %s132 = sand.u32 %s40, 1
        %s133 = smul.addr %s132, 8
        %s134 = scalar_lea.vmem [#allocation2], %s133
        // Predicated region
        $region25: #{tpu_custom_call.1} parent=23 // pred_check
          %p135 = pneg %p53
        $region26: #{tpu_custom_call.1} parent=23 // pred_check_branch
          %137 = sbr.rel (%p135) target = $region28
        $region27: #{tpu_custom_call.1} parent=23 // pred_region
          %138 = dma.done %s131, 128
        $region28: #{tpu_custom_call.1} parent=23 // pred_fallthru
          _
        %s139 = sand.u32 %s40, 1
        %s140 = scalar_lea.sflag [#allocation3], %s139
        %s141 = sand.u32 %s40, 1
        %s142 = smul.addr %s141, 8
        %s143 = scalar_lea.vmem [#allocation2], %s142
        %p144 = pneg %p53
        %p145 = pneg %p50
        %p146 = pneg %p81
        %p147 = pneg %p78
        %s148 = sand.u32 %s68, 1
        %s149 = scalar_lea.sflag [#allocation4], %s148
        %s150 = sand.u32 %s68, 1
        %s151 = smul.addr %s150, 8
        %s152 = scalar_lea.vmem [#allocation5], %s151
        %s153 = smul.u32 2, %s23
        %v154 = vld [vmem:[%s134] sm:$0xf]
        %v157 = vunpack.c.l.s4 1966171168
        %v158 = vunpack.c.0.s8 %v157
        %v159 = vlaneseq
        %v160 = vshrl.u32 %v159, 7
        %v161 = vsub.s32 %v158, %v160
        %v162 = vrot.slane %v154, %v161
        %v163 = vcombine.high %v162, %v162
        %v166 = vlaneseq
        %vm167 = vcmp.ge.s32.totalorder %v166, 0
        %vm168 = vcmp.lt.s32.totalorder %v166, 256
        %vm169 = vmand %vm167, %vm168
        %170 = vst.msk [vmem:[%s152] ss:$2 sm:$0x3] %vm169, %v162
        %s171 = scalar_lea.vmem %s152, 4 [#allocation5]
        %172 = vst.msk [vmem:[%s171] ss:$2 sm:$0x3] %vm169, %v163
        %s173 = scalar_lea.vmem %s134, 4 [#allocation2]
        %v174 = vld [vmem:[%s173] sm:$0xf]
        %v177 = vunpack.c.l.s4 1966171168
        %v178 = vunpack.c.0.s8 %v177
        %v179 = vlaneseq
        %v180 = vshrl.u32 %v179, 7
        %v181 = vsub.s32 %v178, %v180
        %v182 = vrot.slane %v174, %v181
        %v183 = vcombine.high %v182, %v182
        %s186 = scalar_lea.vmem %s152, 1 [#allocation5]
        %187 = vst.msk [vmem:[%s186] ss:$2 sm:$0x3] %vm169, %v182
        %s188 = scalar_lea.vmem %s152, 5 [#allocation5]
        %189 = vst.msk [vmem:[%s188] ss:$2 sm:$0x3] %vm169, %v183
        %s190 = sand.u32 %s68, 1
        %s191 = scalar_lea.sflag [#allocation4], %s190
        %s192 = sand.u32 %s68, 1
        %s193 = smul.addr %s192, 8
        %s194 = scalar_lea.vmem [#allocation5], %s193
        // Predicated region
        $region29: #{tpu_custom_call.1} parent=23 // pred_check
          %p195 = pneg %p78
        $region30: #{tpu_custom_call.1} parent=23 // pred_check_branch
          %197 = sbr.rel (%p195) target = $region32
        $region31: #{tpu_custom_call.1} parent=23 // pred_region
          %s198 = smul.u32 2, %s23
          %s200 = ssub.s32 128, 128
          %201 = vsyncadd %s191, %s200
          %s202 = smul.addr %s198, 2
          %s203 = smul.addr %s22, 4
          %s204 = sadd.s32 %s202, %s203
          %s205 = smul.addr %s204, 32
          %s206 = scalar_lea.hbm %s1, %s205
          %s207 = sshll.u32 %s194, 4
          %s208 = int_to_ptr.vmem [resolvable:$true] %s207
          %213 = dma.vmem_to_hbm [thread:$0]  %s208, 128, %s206, %s191, 64, 64, 4
        $region32: #{tpu_custom_call.1} parent=23 // pred_fallthru
          _
      $region24: #{tpu_custom_call.1} parent=5 // pred_fallthru
        _
      %p214 = scmp.le.s32.totalorder 2, %s13
      // Predicated region
      $region33: #{tpu_custom_call.1} parent=5 // pred_check
        %p215 = pneg %p214
      $region34: #{tpu_custom_call.1} parent=5 // pred_check_branch
        %217 = sbr.rel (%p215) target = $region36
      $region35: #{tpu_custom_call.1} parent=5 // pred_region
        %s218 = ssub.s32 %s13, 2
        // Predicated region
        $region37: #{tpu_custom_call.1} parent=35 // pred_check
          %p219 = pneg %p84
        $region38: #{tpu_custom_call.1} parent=35 // pred_check_branch
          %221 = sbr.rel (%p219) target = $region40
        $region39: #{tpu_custom_call.1} parent=35 // pred_region
          %s222 = sand.u32 %s69, 1
          %s223 = scalar_lea.sflag [#allocation4], %s222
          %s224 = sand.u32 %s69, 1
          %s225 = smul.addr %s224, 8
          %s226 = scalar_lea.vmem [#allocation5], %s225
          %227 = dma.done %s223, 128
        $region40: #{tpu_custom_call.1} parent=35 // pred_fallthru
          _
      $region36: #{tpu_custom_call.1} parent=5 // pred_fallthru
        _
    $region6: #{tpu_custom_call.1} parent=1 // loop_footer
      %s17 = sadd.s32 1, %s13
    $region7: #{tpu_custom_call.1} parent=1 // loop_footer_branch
      %12 = sbr.rel target = $region3
    $region8: #{tpu_custom_call.1} parent=1 // loop_exit
      _
    %228 = vsyncpa [#allocation3], 1
    %s229 = scalar_lea.sflag [#allocation3], 1
    %230 = vsyncpa %s229, 1
    %231 = vsyncpa [#allocation4], 1
    %s232 = scalar_lea.sflag [#allocation4], 1
    %233 = vsyncpa %s232, 1

</llo_original>
